<compile_context>
chip_gen: v7x
topology: tpu7x:2x2x1
jax: 0.10.0
libtpu: 0.0.40
codegen_flags: <defaults>
</compile_context>

<pallas_src>
import jax
import jax.numpy as jnp
from jax.experimental import pallas as pl
from jax.experimental.pallas import tpu as pltpu


LANE = 128          # lane width (last dim)
SUB = 8             # f32 sublane count
N_LAYERS = 5
HIDDEN = (128, 64, 32, 16, 1)


def _round_up(x, m):
    return ((x + m - 1) // m) * m


def _slab_layout(action_dim, n_tools):
    """Row offsets of each section inside the packed (rows, 128) f32 weight/bias slab."""
    off_a = 0                                   # W1 rows multiplying `action`
    off_t = _round_up(action_dim, SUB)          # W1 rows multiplying flattened tool_logits
    off_l2 = off_t + _round_up(n_tools, SUB)    # layers 2..5: one 128-row block each
    off_layers = tuple(off_l2 + i * LANE for i in range(N_LAYERS - 1))
    off_b = off_layers[-1] + LANE               # 8 bias rows (b1..b5 + zero padding)
    total = off_b + SUB
    return off_a, off_t, off_layers, off_b, total


# ---------------------------------------------------------------------------
# One-time parameter packing (init-time; NOT on the per-call path).
# ---------------------------------------------------------------------------
def prepare_packed_params(params, action_dim, n_tools):
    off_a, off_t, off_layers, off_b, total = _slab_layout(action_dim, n_tools)
    slab = jnp.zeros((total, LANE), jnp.float32)

    w1 = params["w1"].astype(jnp.float32)                       # (action_dim + n_tools, 128)
    slab = slab.at[off_a:off_a + action_dim, :].set(w1[:action_dim])
    slab = slab.at[off_t:off_t + n_tools, :].set(w1[action_dim:])

    for li in range(1, N_LAYERS):                               # layers 2..5
        w = params[f"w{li + 1}"].astype(jnp.float32)            # (fan_in, fan_out)
        r, c = w.shape
        slab = slab.at[off_layers[li - 1]:off_layers[li - 1] + r, :c].set(w)

    for li in range(N_LAYERS):                                  # biases b1..b5
        b = params[f"b{li + 1}"].astype(jnp.float32)
        slab = slab.at[off_b + li, :b.shape[0]].set(b)

    return jax.device_put(slab)


# ---------------------------------------------------------------------------
# Fused MLP kernel (single invocation; everything fits trivially in VMEM).
# Zero-padded weight rows/cols + ReLU keep padded hidden lanes at exactly 0,
# so lane 0 of the final row is the exact network output.
# ---------------------------------------------------------------------------
def _make_kernel(action_dim, tool_rows, tool_cols, layout):
    off_a, off_t, off_layers, off_b, _ = layout

    def kernel(act_ref, tool_ref, w_ref, o_ref):
        # Layer 1: concat(action, tool_logits.view(1,-1)) @ W1 + b1, as split dots.
        h = jnp.dot(act_ref[...], w_ref[off_a:off_a + action_dim, :],
                    preferred_element_type=jnp.float32)
        for i in range(tool_rows):                 # row-major flatten of tool_logits
            r0 = off_t + i * tool_cols
            h = h + jnp.dot(tool_ref[i:i + 1, :], w_ref[r0:r0 + tool_cols, :],
                            preferred_element_type=jnp.float32)
        h = jnp.maximum(h + w_ref[off_b:off_b + 1, :], 0.0)

        # Dropout(p=0.2): identity in eval mode.
        # TODO(synk): training-mode dropout (pltpu.prng_* Bernoulli mask) not emitted.

        # Layers 2..4: 128 -> 64 -> 32 -> 16, ReLU (zero-padded lanes stay 0).
        for li in range(1, N_LAYERS - 1):
            r0 = off_layers[li - 1]
            h = jnp.dot(h, w_ref[r0:r0 + LANE, :], preferred_element_type=jnp.float32)
            h = jnp.maximum(h + w_ref[off_b + li:off_b + li + 1, :], 0.0)

        # Layer 5: 16 -> 1, Sigmoid. Only lane 0 is real; write the (1,1) scalar.
        r0 = off_layers[N_LAYERS - 2]
        z = jnp.dot(h, w_ref[r0:r0 + LANE, :], preferred_element_type=jnp.float32)
        z = z + w_ref[off_b + N_LAYERS - 1:off_b + N_LAYERS, :]
        o_ref[...] = jax.nn.sigmoid(z[0:1, 0:1])

    return kernel


@jax.jit
def reward_network_forward(action, tool_logits, w_slab):
    """RewardNetwork.forward: concat(action, tool_logits.view(1,-1)) -> MLP -> (1, 1)."""
    action = action.astype(jnp.float32)
    tool_logits = tool_logits.astype(jnp.float32)
    if tool_logits.ndim != 2:
        tool_logits = tool_logits.reshape(1, -1)

    action_dim = action.shape[-1]
    tool_rows, tool_cols = tool_logits.shape
    n_tools = tool_rows * tool_cols

    layout = _slab_layout(action_dim, n_tools)
    assert w_slab.shape == (layout[-1], LANE), (w_slab.shape, layout[-1])

    flops = 2 * ((action_dim + n_tools) * HIDDEN[0]
                 + sum(HIDDEN[i] * HIDDEN[i + 1] for i in range(N_LAYERS - 1)))
    cost = pl.CostEstimate(
        flops=flops,
        transcendentals=1,  # sigmoid
        bytes_accessed=int(4 * (w_slab.size + action.size + tool_logits.size + 1)),
    )

    vmem = pl.BlockSpec(memory_space=pltpu.MemorySpace.VMEM)
    return pl.pallas_call(
        _make_kernel(action_dim, tool_rows, tool_cols, layout),
        out_shape=jax.ShapeDtypeStruct((1, 1), jnp.float32),
        in_specs=[vmem, vmem, vmem],
        out_specs=vmem,
        cost_estimate=cost,
        compiler_params=pltpu.CompilerParams(vmem_limit_bytes=4 * 1024 * 1024),
    )(action, tool_logits, w_slab)


# ---------------------------------------------------------------------------
# Init + pure-JAX reference
# ---------------------------------------------------------------------------
def init_params(key, input_dim):
    """Deterministic PyTorch-Linear-style init (U[-1/sqrt(fan_in), 1/sqrt(fan_in)])."""
    dims = (input_dim,) + HIDDEN
    params = {}
    for li in range(N_LAYERS):
        fan_in, fan_out = dims[li], dims[li + 1]
        key, kw, kb = jax.random.split(key, 3)
        bound = 1.0 / jnp.sqrt(fan_in)
        params[f"w{li + 1}"] = jax.random.uniform(
            kw, (fan_in, fan_out), jnp.float32, -bound, bound)
        params[f"b{li + 1}"] = jax.random.uniform(
            kb, (fan_out,), jnp.float32, -bound, bound)
    return params


def _reference_forward_f32(action, tool_logits, params):
    """Pure-f32 JAX reference of the PyTorch forward (eval mode)."""
    x = jnp.concatenate([action, tool_logits.reshape(1, -1)], axis=-1).astype(jnp.float32)
    h = jnp.maximum(x @ params["w1"] + params["b1"], 0.0)
    h = jnp.maximum(h @ params["w2"] + params["b2"], 0.0)
    h = jnp.maximum(h @ params["w3"] + params["b3"], 0.0)
    h = jnp.maximum(h @ params["w4"] + params["b4"], 0.0)
    return jax.nn.sigmoid(h @ params["w5"] + params["b5"])


if __name__ == "__main__":
    key = jax.random.PRNGKey(0)
    k_p, k_a, k_t = jax.random.split(key, 3)

    action_dim, tool_shape = 20, (3, 4)        # tool_logits.view(1, -1) -> 12 features
    n_tools = tool_shape[0] * tool_shape[1]
    input_dim = action_dim + n_tools           # 32

    params = init_params(k_p, input_dim)
    w_slab = prepare_packed_params(params, action_dim, n_tools)   # one-time packing

    action = jax.random.normal(k_a, (1, action_dim), jnp.float32)
    tool_logits = jax.random.normal(k_t, tool_shape, jnp.float32)

    out = reward_network_forward(action, tool_logits, w_slab)
    jax.block_until_ready(out)

    ref = _reference_forward_f32(action, tool_logits, params)
    assert out.shape == (1, 1), out.shape
    # Tolerance covers the MXU's default f32-matmul precision on every TPU generation.
    assert jnp.allclose(out, ref, atol=2e-2, rtol=2e-2), (out, ref)

    print("KERNEL_OK")
</pallas_src>

<mosaic_0001>
module attributes {stable_mosaic.version = 11 : i64} {
  func.func @kernel(%arg0: memref<1x20xf32, #tpu.memory_space<vmem>>, %arg1: memref<3x4xf32, #tpu.memory_space<vmem>>, %arg2: memref<560x128xf32, #tpu.memory_space<vmem>>, %arg3: memref<1x1xf32, #tpu.memory_space<vmem>>) attributes {dimension_semantics = [], scalar_prefetch = 0 : i64, scratch_operands = 0 : i64, tpu.core_type = #tpu.core_type<tc>} {
    %c0 = arith.constant 0 : index
    %c0_0 = arith.constant 0 : index
    %0 = vector.load %arg0[%c0, %c0_0] : memref<1x20xf32, #tpu.memory_space<vmem>>, vector<1x20xf32>
    %c0_1 = arith.constant 0 : index
    %c0_2 = arith.constant 0 : index
    %1 = vector.load %arg2[%c0_1, %c0_2] : memref<560x128xf32, #tpu.memory_space<vmem>>, vector<20x128xf32>
    %cst = arith.constant dense<0.000000e+00> : vector<1x128xf32>
    %2 = tpu.matmul %0, %1, %cst {dimension_numbers = #tpu.dot_dimension_numbers<[1], [0], [0], [1], [0, 0, 1, 1], [], []>} : vector<1x20xf32>, vector<20x128xf32>, vector<1x128xf32> -> vector<1x128xf32>
    %c0_3 = arith.constant 0 : index
    %c0_4 = arith.constant 0 : index
    %3 = vector.load %arg1[%c0_3, %c0_4] : memref<3x4xf32, #tpu.memory_space<vmem>>, vector<1x4xf32>
    %c24 = arith.constant 24 : index
    %c0_5 = arith.constant 0 : index
    %4 = vector.load %arg2[%c24, %c0_5] : memref<560x128xf32, #tpu.memory_space<vmem>>, vector<4x128xf32>
    %cst_6 = arith.constant dense<0.000000e+00> : vector<1x128xf32>
    %5 = tpu.matmul %3, %4, %cst_6 {dimension_numbers = #tpu.dot_dimension_numbers<[1], [0], [0], [1], [0, 0, 1, 1], [], []>} : vector<1x4xf32>, vector<4x128xf32>, vector<1x128xf32> -> vector<1x128xf32>
    %6 = arith.addf %2, %5 : vector<1x128xf32>
    %c1 = arith.constant 1 : index
    %c0_7 = arith.constant 0 : index
    %7 = vector.load %arg1[%c1, %c0_7] : memref<3x4xf32, #tpu.memory_space<vmem>>, vector<1x4xf32>
    %c28 = arith.constant 28 : index
    %c0_8 = arith.constant 0 : index
    %8 = vector.load %arg2[%c28, %c0_8] : memref<560x128xf32, #tpu.memory_space<vmem>>, vector<4x128xf32>
    %cst_9 = arith.constant dense<0.000000e+00> : vector<1x128xf32>
    %9 = tpu.matmul %7, %8, %cst_9 {dimension_numbers = #tpu.dot_dimension_numbers<[1], [0], [0], [1], [0, 0, 1, 1], [], []>} : vector<1x4xf32>, vector<4x128xf32>, vector<1x128xf32> -> vector<1x128xf32>
    %10 = arith.addf %6, %9 : vector<1x128xf32>
    %c2 = arith.constant 2 : index
    %c0_10 = arith.constant 0 : index
    %11 = vector.load %arg1[%c2, %c0_10] : memref<3x4xf32, #tpu.memory_space<vmem>>, vector<1x4xf32>
    %c32 = arith.constant 32 : index
    %c0_11 = arith.constant 0 : index
    %12 = vector.load %arg2[%c32, %c0_11] : memref<560x128xf32, #tpu.memory_space<vmem>>, vector<4x128xf32>
    %cst_12 = arith.constant dense<0.000000e+00> : vector<1x128xf32>
    %13 = tpu.matmul %11, %12, %cst_12 {dimension_numbers = #tpu.dot_dimension_numbers<[1], [0], [0], [1], [0, 0, 1, 1], [], []>} : vector<1x4xf32>, vector<4x128xf32>, vector<1x128xf32> -> vector<1x128xf32>
    %14 = arith.addf %10, %13 : vector<1x128xf32>
    %c552 = arith.constant 552 : index
    %c0_13 = arith.constant 0 : index
    %15 = vector.load %arg2[%c552, %c0_13] : memref<560x128xf32, #tpu.memory_space<vmem>>, vector<1x128xf32>
    %16 = arith.addf %14, %15 : vector<1x128xf32>
    %cst_14 = arith.constant 0.000000e+00 : f32
    %17 = vector.broadcast %cst_14 : f32 to vector<1x128xf32>
    %18 = arith.maximumf %16, %17 : vector<1x128xf32>
    %c40 = arith.constant 40 : index
    %c0_15 = arith.constant 0 : index
    %19 = vector.load %arg2[%c40, %c0_15] : memref<560x128xf32, #tpu.memory_space<vmem>>, vector<128x128xf32>
    %cst_16 = arith.constant dense<0.000000e+00> : vector<1x128xf32>
    %20 = tpu.matmul %18, %19, %cst_16 {dimension_numbers = #tpu.dot_dimension_numbers<[1], [0], [0], [1], [0, 0, 1, 1], [], []>} : vector<1x128xf32>, vector<128x128xf32>, vector<1x128xf32> -> vector<1x128xf32>
    %c553 = arith.constant 553 : index
    %c0_17 = arith.constant 0 : index
    %21 = vector.load %arg2[%c553, %c0_17] : memref<560x128xf32, #tpu.memory_space<vmem>>, vector<1x128xf32>
    %22 = arith.addf %20, %21 : vector<1x128xf32>
    %cst_18 = arith.constant 0.000000e+00 : f32
    %23 = vector.broadcast %cst_18 : f32 to vector<1x128xf32>
    %24 = arith.maximumf %22, %23 : vector<1x128xf32>
    %c168 = arith.constant 168 : index
    %c0_19 = arith.constant 0 : index
    %25 = vector.load %arg2[%c168, %c0_19] : memref<560x128xf32, #tpu.memory_space<vmem>>, vector<128x128xf32>
    %cst_20 = arith.constant dense<0.000000e+00> : vector<1x128xf32>
    %26 = tpu.matmul %24, %25, %cst_20 {dimension_numbers = #tpu.dot_dimension_numbers<[1], [0], [0], [1], [0, 0, 1, 1], [], []>} : vector<1x128xf32>, vector<128x128xf32>, vector<1x128xf32> -> vector<1x128xf32>
    %c554 = arith.constant 554 : index
    %c0_21 = arith.constant 0 : index
    %27 = vector.load %arg2[%c554, %c0_21] : memref<560x128xf32, #tpu.memory_space<vmem>>, vector<1x128xf32>
    %28 = arith.addf %26, %27 : vector<1x128xf32>
    %cst_22 = arith.constant 0.000000e+00 : f32
    %29 = vector.broadcast %cst_22 : f32 to vector<1x128xf32>
    %30 = arith.maximumf %28, %29 : vector<1x128xf32>
    %c296 = arith.constant 296 : index
    %c0_23 = arith.constant 0 : index
    %31 = vector.load %arg2[%c296, %c0_23] : memref<560x128xf32, #tpu.memory_space<vmem>>, vector<128x128xf32>
    %cst_24 = arith.constant dense<0.000000e+00> : vector<1x128xf32>
    %32 = tpu.matmul %30, %31, %cst_24 {dimension_numbers = #tpu.dot_dimension_numbers<[1], [0], [0], [1], [0, 0, 1, 1], [], []>} : vector<1x128xf32>, vector<128x128xf32>, vector<1x128xf32> -> vector<1x128xf32>
    %c555 = arith.constant 555 : index
    %c0_25 = arith.constant 0 : index
    %33 = vector.load %arg2[%c555, %c0_25] : memref<560x128xf32, #tpu.memory_space<vmem>>, vector<1x128xf32>
    %34 = arith.addf %32, %33 : vector<1x128xf32>
    %cst_26 = arith.constant 0.000000e+00 : f32
    %35 = vector.broadcast %cst_26 : f32 to vector<1x128xf32>
    %36 = arith.maximumf %34, %35 : vector<1x128xf32>
    %c424 = arith.constant 424 : index
    %c0_27 = arith.constant 0 : index
    %37 = vector.load %arg2[%c424, %c0_27] : memref<560x128xf32, #tpu.memory_space<vmem>>, vector<128x128xf32>
    %cst_28 = arith.constant dense<0.000000e+00> : vector<1x128xf32>
    %38 = tpu.matmul %36, %37, %cst_28 {dimension_numbers = #tpu.dot_dimension_numbers<[1], [0], [0], [1], [0, 0, 1, 1], [], []>} : vector<1x128xf32>, vector<128x128xf32>, vector<1x128xf32> -> vector<1x128xf32>
    %c556 = arith.constant 556 : index
    %c0_29 = arith.constant 0 : index
    %39 = vector.load %arg2[%c556, %c0_29] : memref<560x128xf32, #tpu.memory_space<vmem>>, vector<1x128xf32>
    %40 = arith.addf %38, %39 : vector<1x128xf32>
    %41 = vector.extract_strided_slice %40 {offsets = [0, 0], sizes = [1, 1], strides = [1, 1]} : vector<1x128xf32> to vector<1x1xf32>
    %42 = arith.negf %41 : vector<1x1xf32>
    %43 = math.exp %42 : vector<1x1xf32>
    %cst_30 = arith.constant 1.000000e+00 : f32
    %44 = vector.broadcast %cst_30 : f32 to vector<1x1xf32>
    %45 = arith.addf %44, %43 : vector<1x1xf32>
    %46 = arith.divf %44, %45 : vector<1x1xf32>
    %c0_31 = arith.constant 0 : index
    %c0_32 = arith.constant 0 : index
    %47 = vector.load %arg3[%c0_31, %c0_32] : memref<1x1xf32, #tpu.memory_space<vmem>>, vector<1x1xf32>
    tpu.vector_store %arg3[%c0_31, %c0_32], %46 {strides = array<i32>} : memref<1x1xf32, #tpu.memory_space<vmem>>, vector<1x1xf32>,
    return
  }
}

</mosaic_0001>

<llo_original>
// kernel: reward_network_forward.1
$region0: #{reward_network_forward.1}
  #allocation0 [shape = 'u32[]', space=smem, size = 0x4, offset = 0x4, fixed_abs, tag = 'smem constant byte address 0x4 - core index']
  #allocation1 [shape = 'u32[144,128]{1,0:T(1,128)}', space=vmem, size = 0x12000, scoped, tag = 'internal scratch']
  %s0 = inlined_call_operand.hbm [shape: f32[1,20], index: 0, kind: input, shape index: {}]
  %s1 = inlined_call_operand.hbm [shape: f32[3,4], index: 1, kind: input, shape index: {}]
  %s2 = inlined_call_operand.hbm [shape: f32[560,128], index: 2, kind: input, shape index: {}]
  %s3 = inlined_call_operand.hbm [shape: f32[1,1], index: 3, kind: output, shape index: {}]
  %s4 = sld [smem:[#allocation0]]
  $region34: #{reward_network_forward.1} parent=0
    _
  %s6 = ssub.s32 1, %s4
  %s7 = scalar_select 0, %s6, %s4
  $region1: #{reward_network_forward.1} parent=0
    #allocation2 [shape = 'u8[512]{0}', space=vmem, size = 0x400, scoped, tag = 'input window, operand 0, single buffered']
    #allocation3 [shape = 's32[1]{0}', space=sflag, size = 0x4, scoped, tag = 'scoped memory for reward_network_forward.1']
    #allocation4 [shape = 's32[1]{0}', space=sflag, size = 0x4, scoped, tag = 'scoped memory for reward_network_forward.1']
    #allocation5 [shape = 'u8[2048]{0}', space=vmem, size = 0x800, scoped, tag = 'input window, operand 1, single buffered']
    #allocation6 [shape = 's32[1]{0}', space=sflag, size = 0x4, scoped, tag = 'scoped memory for reward_network_forward.1']
    #allocation7 [shape = 'u8[286720]{0}', space=vmem, size = 0x46000, scoped, tag = 'input window, operand 2, single buffered']
    #allocation8 [shape = 'u8[512]{0}', space=vmem, size = 0x400, scoped, tag = 'output window, operand 0, single buffered']
    %8 = vsyncpa [#allocation3], 0
    %9 = vsyncpa [#allocation6], 0
    %10 = vsyncpa [#allocation4], 0
    // Predicated region
    $region2: #{reward_network_forward.1} parent=1 // pred_check
      _
    $region3: #{reward_network_forward.1} parent=1 // pred_check_branch
      %12 = sbr.rel (0) target = $region5
    $region4: #{reward_network_forward.1} parent=1 // pred_region
      %s14 = ssub.s32 16, 16
      %15 = vsyncadd [#allocation3], %s14
      %s17 = sshll.u32 [#allocation2], 4
      %s18 = int_to_ptr.vmem [resolvable:$true] %s17
      %20 = dma.hbm_to_vmem [thread:$0]  %s0, 16, %s18, [#allocation3]
    $region5: #{reward_network_forward.1} parent=1 // pred_fallthru
      _
    // Predicated region
    $region6: #{reward_network_forward.1} parent=1 // pred_check
      _
    $region7: #{reward_network_forward.1} parent=1 // pred_check_branch
      %22 = sbr.rel (0) target = $region9
    $region8: #{reward_network_forward.1} parent=1 // pred_region
      %s24 = ssub.s32 64, 64
      %25 = vsyncadd [#allocation6], %s24
      %s27 = sshll.u32 [#allocation5], 4
      %s28 = int_to_ptr.vmem [resolvable:$true] %s27
      %30 = dma.hbm_to_vmem [thread:$0]  %s1, 64, %s28, [#allocation6]
    $region9: #{reward_network_forward.1} parent=1 // pred_fallthru
      _
    // Predicated region
    $region10: #{reward_network_forward.1} parent=1 // pred_check
      _
    $region11: #{reward_network_forward.1} parent=1 // pred_check_branch
      %32 = sbr.rel (0) target = $region13
    $region12: #{reward_network_forward.1} parent=1 // pred_region
      %s34 = ssub.s32 8960, 8960
      %35 = vsyncadd [#allocation6], %s34
      %s36 = sshll.u32 [#allocation7], 4
      %s37 = int_to_ptr.vmem [resolvable:$true] %s36
      %42 = dma.hbm_to_vmem [thread:$0]  %s2, 8960, %s37, [#allocation6], 128, 128, 8
    $region13: #{reward_network_forward.1} parent=1 // pred_fallthru
      _
    // Predicated region
    $region14: #{reward_network_forward.1} parent=1 // pred_check
      _
    $region15: #{reward_network_forward.1} parent=1 // pred_check_branch
      %44 = sbr.rel (0) target = $region17
    $region16: #{reward_network_forward.1} parent=1 // pred_region
      %45 = dma.done [#allocation3], 16
    $region17: #{reward_network_forward.1} parent=1 // pred_fallthru
      _
    // Predicated region
    $region18: #{reward_network_forward.1} parent=1 // pred_check
      _
    $region19: #{reward_network_forward.1} parent=1 // pred_check_branch
      %47 = sbr.rel (0) target = $region21
    $region20: #{reward_network_forward.1} parent=1 // pred_region
      %48 = dma.done [#allocation6], 64
    $region21: #{reward_network_forward.1} parent=1 // pred_fallthru
      _
    // Predicated region
    $region22: #{reward_network_forward.1} parent=1 // pred_check
      _
    $region23: #{reward_network_forward.1} parent=1 // pred_check_branch
      %50 = sbr.rel (0) target = $region25
    $region24: #{reward_network_forward.1} parent=1 // pred_region
      %51 = dma.done [#allocation6], 8960
    $region25: #{reward_network_forward.1} parent=1 // pred_fallthru
      _
    %v52 = vld [vmem:[#allocation2] sm:$0x1]
    %v53 = vld [vmem:[#allocation7] sm:$0xff]
    %v54 = vld [vmem:[#allocation7 + $0x8] sm:$0xff]
    %v55 = vld [vmem:[#allocation7 + $0x10] sm:$0xf]
    %v56 = vld [vmem:[#allocation5] sm:$0x1]
    %v57 = vld [vmem:[#allocation7 + $0x18] sm:$0xf]
    %vm58 = vcmask 31744
    %v60 = vsel %vm58, %v56, 0
    %vm62 = vcmask 1043456
    %v64 = vsel %vm62, %v57, 0
    %66 = vmatprep.subr.mxu0 0.0
    %67 = vmatpush1.msra.mxu0 %v64
    %68 = vmatprep.subr.mxu0 0.0
    %69 = vmatpush1.msra.mxu0 0.0
    %70 = vmatprep.subr.mxu0 0.0
    %71 = vmatpush1.msra.mxu0 0.0
    %72 = vmatprep.subr.mxu0 0.0
    %73 = vmatpush1.msra.mxu0 0.0
    %74 = vmatprep.subr.mxu0 0.0
    %75 = vmatpush1.msra.mxu0 0.0
    %76 = vmatprep.subr.mxu0 0.0
    %77 = vmatpush1.msra.mxu0 0.0
    %78 = vmatprep.subr.mxu0 0.0
    %79 = vmatpush1.msra.mxu0 0.0
    %80 = vmatprep.subr.mxu0 0.0
    %81 = vmatpush1.msra.mxu0 0.0
    %82 = vmatprep.subr.mxu0 0.0
    %83 = vmatpush1.msra.mxu0 0.0
    %84 = vmatprep.subr.mxu0 0.0
    %85 = vmatpush1.msra.mxu0 0.0
    %86 = vmatprep.subr.mxu0 0.0
    %87 = vmatpush1.msra.mxu0 0.0
    %88 = vmatprep.subr.mxu0 0.0
    %89 = vmatpush1.msra.mxu0 0.0
    %90 = vmatprep.subr.mxu0 0.0
    %91 = vmatpush1.msra.mxu0 0.0
    %92 = vmatprep.subr.mxu0 0.0
    %93 = vmatpush1.msra.mxu0 0.0
    %94 = vmatprep.subr.mxu0 0.0
    %95 = vmatpush1.msra.mxu0 0.0
    %96 = vmatprep.subr.mxu0 0.0
    %97 = vmatpush1.msra.mxu0 0.0
    %98 = vmatprep.subr.mxu0 0.0
    %99 = vmatpush1.msra.mxu0 0.0
    %100 = vmatprep.subr.mxu0 0.0
    %101 = vmatpush1.msra.mxu0 0.0
    %102 = vmatprep.subr.mxu0 0.0
    %103 = vmatpush1.msra.mxu0 0.0
    %104 = vmatprep.subr.mxu0 0.0
    %105 = vmatpush1.msra.mxu0 0.0
    %106 = vmatprep.subr.mxu0 0.0
    %107 = vmatpush1.msra.mxu0 0.0
    %108 = vmatprep.subr.mxu0 0.0
    %109 = vmatpush1.msra.mxu0 0.0
    %110 = vmatprep.subr.mxu0 0.0
    %111 = vmatpush1.msra.mxu0 0.0
    %112 = vmatprep.subr.mxu0 0.0
    %113 = vmatpush1.msra.mxu0 0.0
    %114 = vmatprep.subr.mxu0 0.0
    %115 = vmatpush1.msra.mxu0 0.0
    %116 = vmatprep.subr.mxu0 0.0
    %117 = vmatpush1.msra.mxu0 0.0
    %118 = vmatprep.subr.mxu0 0.0
    %119 = vmatpush1.msra.mxu0 0.0
    %120 = vmatprep.subr.mxu0 0.0
    %121 = vmatpush1.msra.mxu0 0.0
    %122 = vmatprep.subr.mxu0 0.0
    %123 = vmatpush1.msra.mxu0 0.0
    %124 = vmatprep.subr.mxu0 0.0
    %125 = vmatpush1.msra.mxu0 0.0
    %126 = vmatprep.subr.mxu0 0.0
    %127 = vmatpush1.msra.mxu0 0.0
    %128 = vmatprep.subr.mxu0 0.0
    %129 = vmatpush1.msra.mxu0 0.0
    %130 = vmatprep.mubr.f32.mxu0 0.0
    %131 = vmatmul.mubr.f32.gmra.mrb[0].mxu0 %v60
    %v132 = vpop.f32.mrb[0].mxu0
    %v133 = vadd.f32 0.0, %v132
    %v134 = vpop.f32.mrb[0].mxu0
    %135 = vdwg.mxu0
    %vm136 = vcmask 162816
    %v138 = vsel %vm136, %v52, 0
    %v141 = vsel %vm62, %v55, 0
    %143 = vmatprep.subr.mxu0 0.0
    %144 = vmatpush1.msra.mxu0 %v53
    %145 = vmatprep.subr.mxu0 0.0
    %146 = vmatpush1.msra.mxu0 %v54
    %147 = vmatprep.subr.mxu0 0.0
    %148 = vmatpush1.msra.mxu0 %v141
    %149 = vmatprep.subr.mxu0 0.0
    %150 = vmatpush1.msra.mxu0 0.0
    %151 = vmatprep.subr.mxu0 0.0
    %152 = vmatpush1.msra.mxu0 0.0
    %153 = vmatprep.subr.mxu0 0.0
    %154 = vmatpush1.msra.mxu0 0.0
    %155 = vmatprep.subr.mxu0 0.0
    %156 = vmatpush1.msra.mxu0 0.0
    %157 = vmatprep.subr.mxu0 0.0
    %158 = vmatpush1.msra.mxu0 0.0
    %159 = vmatprep.subr.mxu0 0.0
    %160 = vmatpush1.msra.mxu0 0.0
    %161 = vmatprep.subr.mxu0 0.0
    %162 = vmatpush1.msra.mxu0 0.0
    %163 = vmatprep.subr.mxu0 0.0
    %164 = vmatpush1.msra.mxu0 0.0
    %165 = vmatprep.subr.mxu0 0.0
    %166 = vmatpush1.msra.mxu0 0.0
    %167 = vmatprep.subr.mxu0 0.0
    %168 = vmatpush1.msra.mxu0 0.0
    %169 = vmatprep.subr.mxu0 0.0
    %170 = vmatpush1.msra.mxu0 0.0
    %171 = vmatprep.subr.mxu0 0.0
    %172 = vmatpush1.msra.mxu0 0.0
    %173 = vmatprep.subr.mxu0 0.0
    %174 = vmatpush1.msra.mxu0 0.0
    %175 = vmatprep.subr.mxu0 0.0
    %176 = vmatpush1.msra.mxu0 0.0
    %177 = vmatprep.subr.mxu0 0.0
    %178 = vmatpush1.msra.mxu0 0.0
    %179 = vmatprep.subr.mxu0 0.0
    %180 = vmatpush1.msra.mxu0 0.0
    %181 = vmatprep.subr.mxu0 0.0
    %182 = vmatpush1.msra.mxu0 0.0
    %183 = vmatprep.subr.mxu0 0.0
    %184 = vmatpush1.msra.mxu0 0.0
    %185 = vmatprep.subr.mxu0 0.0
    %186 = vmatpush1.msra.mxu0 0.0
    %187 = vmatprep.subr.mxu0 0.0
    %188 = vmatpush1.msra.mxu0 0.0
    %189 = vmatprep.subr.mxu0 0.0
    %190 = vmatpush1.msra.mxu0 0.0
    %191 = vmatprep.subr.mxu0 0.0
    %192 = vmatpush1.msra.mxu0 0.0
    %193 = vmatprep.subr.mxu0 0.0
    %194 = vmatpush1.msra.mxu0 0.0
    %195 = vmatprep.subr.mxu0 0.0
    %196 = vmatpush1.msra.mxu0 0.0
    %197 = vmatprep.subr.mxu0 0.0
    %198 = vmatpush1.msra.mxu0 0.0
    %199 = vmatprep.subr.mxu0 0.0
    %200 = vmatpush1.msra.mxu0 0.0
    %201 = vmatprep.subr.mxu0 0.0
    %202 = vmatpush1.msra.mxu0 0.0
    %203 = vmatprep.subr.mxu0 0.0
    %204 = vmatpush1.msra.mxu0 0.0
    %205 = vmatprep.subr.mxu0 0.0
    %206 = vmatpush1.msra.mxu0 0.0
    %207 = vmatprep.mubr.f32.mxu0 0.0
    %208 = vmatmul.mubr.f32.gmra.mrb[0].mxu0 %v138
    %v209 = vpop.f32.mrb[0].mxu0
    %v210 = vadd.f32 %v133, %v209
    %v211 = vpop.f32.mrb[0].mxu0
    %212 = vdwg.mxu0
    %v213 = vld [vmem:[#allocation5 + $0x1] sm:$0x1]
    %v214 = vld [vmem:[#allocation7 + $0x1c] sm:$0xf]
    %v216 = vsel %vm58, %v213, 0
    %v219 = vsel %vm62, %v214, 0
    %221 = vmatprep.subr.mxu0 0.0
    %222 = vmatpush1.msra.mxu0 %v219
    %223 = vmatprep.subr.mxu0 0.0
    %224 = vmatpush1.msra.mxu0 0.0
    %225 = vmatprep.subr.mxu0 0.0
    %226 = vmatpush1.msra.mxu0 0.0
    %227 = vmatprep.subr.mxu0 0.0
    %228 = vmatpush1.msra.mxu0 0.0
    %229 = vmatprep.subr.mxu0 0.0
    %230 = vmatpush1.msra.mxu0 0.0
    %231 = vmatprep.subr.mxu0 0.0
    %232 = vmatpush1.msra.mxu0 0.0
    %233 = vmatprep.subr.mxu0 0.0
    %234 = vmatpush1.msra.mxu0 0.0
    %235 = vmatprep.subr.mxu0 0.0
    %236 = vmatpush1.msra.mxu0 0.0
    %237 = vmatprep.subr.mxu0 0.0
    %238 = vmatpush1.msra.mxu0 0.0
    %239 = vmatprep.subr.mxu0 0.0
    %240 = vmatpush1.msra.mxu0 0.0
    %241 = vmatprep.subr.mxu0 0.0
    %242 = vmatpush1.msra.mxu0 0.0
    %243 = vmatprep.subr.mxu0 0.0
    %244 = vmatpush1.msra.mxu0 0.0
    %245 = vmatprep.subr.mxu0 0.0
    %246 = vmatpush1.msra.mxu0 0.0
    %247 = vmatprep.subr.mxu0 0.0
    %248 = vmatpush1.msra.mxu0 0.0
    %249 = vmatprep.subr.mxu0 0.0
    %250 = vmatpush1.msra.mxu0 0.0
    %251 = vmatprep.subr.mxu0 0.0
    %252 = vmatpush1.msra.mxu0 0.0
    %253 = vmatprep.subr.mxu0 0.0
    %254 = vmatpush1.msra.mxu0 0.0
    %255 = vmatprep.subr.mxu0 0.0
    %256 = vmatpush1.msra.mxu0 0.0
    %257 = vmatprep.subr.mxu0 0.0
    %258 = vmatpush1.msra.mxu0 0.0
    %259 = vmatprep.subr.mxu0 0.0
    %260 = vmatpush1.msra.mxu0 0.0
    %261 = vmatprep.subr.mxu0 0.0
    %262 = vmatpush1.msra.mxu0 0.0
    %263 = vmatprep.subr.mxu0 0.0
    %264 = vmatpush1.msra.mxu0 0.0
    %265 = vmatprep.subr.mxu0 0.0
    %266 = vmatpush1.msra.mxu0 0.0
    %267 = vmatprep.subr.mxu0 0.0
    %268 = vmatpush1.msra.mxu0 0.0
    %269 = vmatprep.subr.mxu0 0.0
    %270 = vmatpush1.msra.mxu0 0.0
    %271 = vmatprep.subr.mxu0 0.0
    %272 = vmatpush1.msra.mxu0 0.0
    %273 = vmatprep.subr.mxu0 0.0
    %274 = vmatpush1.msra.mxu0 0.0
    %275 = vmatprep.subr.mxu0 0.0
    %276 = vmatpush1.msra.mxu0 0.0
    %277 = vmatprep.subr.mxu0 0.0
    %278 = vmatpush1.msra.mxu0 0.0
    %279 = vmatprep.subr.mxu0 0.0
    %280 = vmatpush1.msra.mxu0 0.0
    %281 = vmatprep.subr.mxu0 0.0
    %282 = vmatpush1.msra.mxu0 0.0
    %283 = vmatprep.subr.mxu0 0.0
    %284 = vmatpush1.msra.mxu0 0.0
    %285 = vmatprep.mubr.f32.mxu0 0.0
    %286 = vmatmul.mubr.f32.gmra.mrb[0].mxu0 %v216
    %v287 = vpop.f32.mrb[0].mxu0
    %v288 = vadd.f32 0.0, %v287
    %v289 = vpop.f32.mrb[0].mxu0
    %290 = vdwg.mxu0
    %v291 = vadd.f32 %v210, %v288
    %v292 = vld [vmem:[#allocation5 + $0x2] sm:$0x1]
    %v293 = vld [vmem:[#allocation7 + $0x20] sm:$0xf]
    %v295 = vsel %vm58, %v292, 0
    %v298 = vsel %vm62, %v293, 0
    %300 = vmatprep.subr.mxu0 0.0
    %301 = vmatpush1.msra.mxu0 %v298
    %302 = vmatprep.subr.mxu0 0.0
    %303 = vmatpush1.msra.mxu0 0.0
    %304 = vmatprep.subr.mxu0 0.0
    %305 = vmatpush1.msra.mxu0 0.0
    %306 = vmatprep.subr.mxu0 0.0
    %307 = vmatpush1.msra.mxu0 0.0
    %308 = vmatprep.subr.mxu0 0.0
    %309 = vmatpush1.msra.mxu0 0.0
    %310 = vmatprep.subr.mxu0 0.0
    %311 = vmatpush1.msra.mxu0 0.0
    %312 = vmatprep.subr.mxu0 0.0
    %313 = vmatpush1.msra.mxu0 0.0
    %314 = vmatprep.subr.mxu0 0.0
    %315 = vmatpush1.msra.mxu0 0.0
    %316 = vmatprep.subr.mxu0 0.0
    %317 = vmatpush1.msra.mxu0 0.0
    %318 = vmatprep.subr.mxu0 0.0
    %319 = vmatpush1.msra.mxu0 0.0
    %320 = vmatprep.subr.mxu0 0.0
    %321 = vmatpush1.msra.mxu0 0.0
    %322 = vmatprep.subr.mxu0 0.0
    %323 = vmatpush1.msra.mxu0 0.0
    %324 = vmatprep.subr.mxu0 0.0
    %325 = vmatpush1.msra.mxu0 0.0
    %326 = vmatprep.subr.mxu0 0.0
    %327 = vmatpush1.msra.mxu0 0.0
    %328 = vmatprep.subr.mxu0 0.0
    %329 = vmatpush1.msra.mxu0 0.0
    %330 = vmatprep.subr.mxu0 0.0
    %331 = vmatpush1.msra.mxu0 0.0
    %332 = vmatprep.subr.mxu0 0.0
    %333 = vmatpush1.msra.mxu0 0.0
    %334 = vmatprep.subr.mxu0 0.0
    %335 = vmatpush1.msra.mxu0 0.0
    %336 = vmatprep.subr.mxu0 0.0
    %337 = vmatpush1.msra.mxu0 0.0
    %338 = vmatprep.subr.mxu0 0.0
    %339 = vmatpush1.msra.mxu0 0.0
    %340 = vmatprep.subr.mxu0 0.0
    %341 = vmatpush1.msra.mxu0 0.0
    %342 = vmatprep.subr.mxu0 0.0
    %343 = vmatpush1.msra.mxu0 0.0
    %344 = vmatprep.subr.mxu0 0.0
    %345 = vmatpush1.msra.mxu0 0.0
    %346 = vmatprep.subr.mxu0 0.0
    %347 = vmatpush1.msra.mxu0 0.0
    %348 = vmatprep.subr.mxu0 0.0
    %349 = vmatpush1.msra.mxu0 0.0
    %350 = vmatprep.subr.mxu0 0.0
    %351 = vmatpush1.msra.mxu0 0.0
    %352 = vmatprep.subr.mxu0 0.0
    %353 = vmatpush1.msra.mxu0 0.0
    %354 = vmatprep.subr.mxu0 0.0
    %355 = vmatpush1.msra.mxu0 0.0
    %356 = vmatprep.subr.mxu0 0.0
    %357 = vmatpush1.msra.mxu0 0.0
    %358 = vmatprep.subr.mxu0 0.0
    %359 = vmatpush1.msra.mxu0 0.0
    %360 = vmatprep.subr.mxu0 0.0
    %361 = vmatpush1.msra.mxu0 0.0
    %362 = vmatprep.subr.mxu0 0.0
    %363 = vmatpush1.msra.mxu0 0.0
    %364 = vmatprep.mubr.f32.mxu0 0.0
    %365 = vmatmul.mubr.f32.gmra.mrb[0].mxu0 %v295
    %v366 = vpop.f32.mrb[0].mxu0
    %v367 = vadd.f32 0.0, %v366
    %v368 = vpop.f32.mrb[0].mxu0
    %369 = vdwg.mxu0
    %v370 = vadd.f32 %v291, %v367
    %v371 = vld [vmem:[#allocation7 + $0x228] sm:$0x1]
    %v372 = vadd.f32 %v370, %v371
    %v373 = vmax.f32 %v372, 0.0
    %v374 = vld [vmem:[#allocation7 + $0x28] sm:$0xff]
    %v375 = vld [vmem:[#allocation7 + $0x30] sm:$0xff]
    %v376 = vld [vmem:[#allocation7 + $0x38] sm:$0xff]
    %v377 = vld [vmem:[#allocation7 + $0x40] sm:$0xff]
    %v378 = vld [vmem:[#allocation7 + $0x48] sm:$0xff]
    %v379 = vld [vmem:[#allocation7 + $0x50] sm:$0xff]
    %v380 = vld [vmem:[#allocation7 + $0x58] sm:$0xff]
    %v381 = vld [vmem:[#allocation7 + $0x60] sm:$0xff]
    %v382 = vld [vmem:[#allocation7 + $0x68] sm:$0xff]
    %v383 = vld [vmem:[#allocation7 + $0x70] sm:$0xff]
    %v384 = vld [vmem:[#allocation7 + $0x78] sm:$0xff]
    %v385 = vld [vmem:[#allocation7 + $0x80] sm:$0xff]
    %v386 = vld [vmem:[#allocation7 + $0x88] sm:$0xff]
    %v387 = vld [vmem:[#allocation7 + $0x90] sm:$0xff]
    %v388 = vld [vmem:[#allocation7 + $0x98] sm:$0xff]
    %v389 = vld [vmem:[#allocation7 + $0xa0] sm:$0xff]
    %v390 = vld [vmem:[#allocation7 + $0x229] sm:$0x1]
    %391 = vmatprep.subr.mxu0 0.0
    %392 = vmatpush1.msra.mxu0 %v374
    %393 = vmatprep.subr.mxu0 0.0
    %394 = vmatpush1.msra.mxu0 %v375
    %395 = vmatprep.subr.mxu0 0.0
    %396 = vmatpush1.msra.mxu0 %v376
    %397 = vmatprep.subr.mxu0 0.0
    %398 = vmatpush1.msra.mxu0 %v377
    %399 = vmatprep.subr.mxu0 0.0
    %400 = vmatpush1.msra.mxu0 %v378
    %401 = vmatprep.subr.mxu0 0.0
    %402 = vmatpush1.msra.mxu0 %v379
    %403 = vmatprep.subr.mxu0 0.0
    %404 = vmatpush1.msra.mxu0 %v380
    %405 = vmatprep.subr.mxu0 0.0
    %406 = vmatpush1.msra.mxu0 %v381
    %407 = vmatprep.subr.mxu0 0.0
    %408 = vmatpush1.msra.mxu0 %v382
    %409 = vmatprep.subr.mxu0 0.0
    %410 = vmatpush1.msra.mxu0 %v383
    %411 = vmatprep.subr.mxu0 0.0
    %412 = vmatpush1.msra.mxu0 %v384
    %413 = vmatprep.subr.mxu0 0.0
    %414 = vmatpush1.msra.mxu0 %v385
    %415 = vmatprep.subr.mxu0 0.0
    %416 = vmatpush1.msra.mxu0 %v386
    %417 = vmatprep.subr.mxu0 0.0
    %418 = vmatpush1.msra.mxu0 %v387
    %419 = vmatprep.subr.mxu0 0.0
    %420 = vmatpush1.msra.mxu0 %v388
    %421 = vmatprep.subr.mxu0 0.0
    %422 = vmatpush1.msra.mxu0 %v389
    %423 = vmatprep.subr.mxu0 0.0
    %424 = vmatpush1.msra.mxu0 0.0
    %425 = vmatprep.subr.mxu0 0.0
    %426 = vmatpush1.msra.mxu0 0.0
    %427 = vmatprep.subr.mxu0 0.0
    %428 = vmatpush1.msra.mxu0 0.0
    %429 = vmatprep.subr.mxu0 0.0
    %430 = vmatpush1.msra.mxu0 0.0
    %431 = vmatprep.subr.mxu0 0.0
    %432 = vmatpush1.msra.mxu0 0.0
    %433 = vmatprep.subr.mxu0 0.0
    %434 = vmatpush1.msra.mxu0 0.0
    %435 = vmatprep.subr.mxu0 0.0
    %436 = vmatpush1.msra.mxu0 0.0
    %437 = vmatprep.subr.mxu0 0.0
    %438 = vmatpush1.msra.mxu0 0.0
    %439 = vmatprep.subr.mxu0 0.0
    %440 = vmatpush1.msra.mxu0 0.0
    %441 = vmatprep.subr.mxu0 0.0
    %442 = vmatpush1.msra.mxu0 0.0
    %443 = vmatprep.subr.mxu0 0.0
    %444 = vmatpush1.msra.mxu0 0.0
    %445 = vmatprep.subr.mxu0 0.0
    %446 = vmatpush1.msra.mxu0 0.0
    %447 = vmatprep.subr.mxu0 0.0
    %448 = vmatpush1.msra.mxu0 0.0
    %449 = vmatprep.subr.mxu0 0.0
    %450 = vmatpush1.msra.mxu0 0.0
    %451 = vmatprep.subr.mxu0 0.0
    %452 = vmatpush1.msra.mxu0 0.0
    %453 = vmatprep.subr.mxu0 0.0
    %454 = vmatpush1.msra.mxu0 0.0
    %455 = vmatprep.mubr.f32.mxu0 0.0
    %456 = vmatmul.mubr.f32.gmra.mrb[0].mxu0 %v373
    %v457 = vpop.f32.mrb[0].mxu0
    %v458 = vadd.f32 %v390, %v457
    %v459 = vpop.f32.mrb[0].mxu0
    %460 = vdwg.mxu0
    %v461 = vmax.f32 %v458, 0.0
    %v462 = vld [vmem:[#allocation7 + $0xa8] sm:$0xff]
    %v463 = vld [vmem:[#allocation7 + $0xb0] sm:$0xff]
    %v464 = vld [vmem:[#allocation7 + $0xb8] sm:$0xff]
    %v465 = vld [vmem:[#allocation7 + $0xc0] sm:$0xff]
    %v466 = vld [vmem:[#allocation7 + $0xc8] sm:$0xff]
    %v467 = vld [vmem:[#allocation7 + $0xd0] sm:$0xff]
    %v468 = vld [vmem:[#allocation7 + $0xd8] sm:$0xff]
    %v469 = vld [vmem:[#allocation7 + $0xe0] sm:$0xff]
    %v470 = vld [vmem:[#allocation7 + $0xe8] sm:$0xff]
    %v471 = vld [vmem:[#allocation7 + $0xf0] sm:$0xff]
    %v472 = vld [vmem:[#allocation7 + $0xf8] sm:$0xff]
    %v473 = vld [vmem:[#allocation7 + $0x100] sm:$0xff]
    %v474 = vld [vmem:[#allocation7 + $0x108] sm:$0xff]
    %v475 = vld [vmem:[#allocation7 + $0x110] sm:$0xff]
    %v476 = vld [vmem:[#allocation7 + $0x118] sm:$0xff]
    %v477 = vld [vmem:[#allocation7 + $0x120] sm:$0xff]
    %v478 = vld [vmem:[#allocation7 + $0x22a] sm:$0x1]
    %479 = vmatprep.subr.mxu0 0.0
    %480 = vmatpush1.msra.mxu0 %v462
    %481 = vmatprep.subr.mxu0 0.0
    %482 = vmatpush1.msra.mxu0 %v463
    %483 = vmatprep.subr.mxu0 0.0
    %484 = vmatpush1.msra.mxu0 %v464
    %485 = vmatprep.subr.mxu0 0.0
    %486 = vmatpush1.msra.mxu0 %v465
    %487 = vmatprep.subr.mxu0 0.0
    %488 = vmatpush1.msra.mxu0 %v466
    %489 = vmatprep.subr.mxu0 0.0
    %490 = vmatpush1.msra.mxu0 %v467
    %491 = vmatprep.subr.mxu0 0.0
    %492 = vmatpush1.msra.mxu0 %v468
    %493 = vmatprep.subr.mxu0 0.0
    %494 = vmatpush1.msra.mxu0 %v469
    %495 = vmatprep.subr.mxu0 0.0
    %496 = vmatpush1.msra.mxu0 %v470
    %497 = vmatprep.subr.mxu0 0.0
    %498 = vmatpush1.msra.mxu0 %v471
    %499 = vmatprep.subr.mxu0 0.0
    %500 = vmatpush1.msra.mxu0 %v472
    %501 = vmatprep.subr.mxu0 0.0
    %502 = vmatpush1.msra.mxu0 %v473
    %503 = vmatprep.subr.mxu0 0.0
    %504 = vmatpush1.msra.mxu0 %v474
    %505 = vmatprep.subr.mxu0 0.0
    %506 = vmatpush1.msra.mxu0 %v475
    %507 = vmatprep.subr.mxu0 0.0
    %508 = vmatpush1.msra.mxu0 %v476
    %509 = vmatprep.subr.mxu0 0.0
    %510 = vmatpush1.msra.mxu0 %v477
    %511 = vmatprep.subr.mxu0 0.0
    %512 = vmatpush1.msra.mxu0 0.0
    %513 = vmatprep.subr.mxu0 0.0
    %514 = vmatpush1.msra.mxu0 0.0
    %515 = vmatprep.subr.mxu0 0.0
    %516 = vmatpush1.msra.mxu0 0.0
    %517 = vmatprep.subr.mxu0 0.0
    %518 = vmatpush1.msra.mxu0 0.0
    %519 = vmatprep.subr.mxu0 0.0
    %520 = vmatpush1.msra.mxu0 0.0
    %521 = vmatprep.subr.mxu0 0.0
    %522 = vmatpush1.msra.mxu0 0.0
    %523 = vmatprep.subr.mxu0 0.0
    %524 = vmatpush1.msra.mxu0 0.0
    %525 = vmatprep.subr.mxu0 0.0
    %526 = vmatpush1.msra.mxu0 0.0
    %527 = vmatprep.subr.mxu0 0.0
    %528 = vmatpush1.msra.mxu0 0.0
    %529 = vmatprep.subr.mxu0 0.0
    %530 = vmatpush1.msra.mxu0 0.0
    %531 = vmatprep.subr.mxu0 0.0
    %532 = vmatpush1.msra.mxu0 0.0
    %533 = vmatprep.subr.mxu0 0.0
    %534 = vmatpush1.msra.mxu0 0.0
    %535 = vmatprep.subr.mxu0 0.0
    %536 = vmatpush1.msra.mxu0 0.0
    %537 = vmatprep.subr.mxu0 0.0
    %538 = vmatpush1.msra.mxu0 0.0
    %539 = vmatprep.subr.mxu0 0.0
    %540 = vmatpush1.msra.mxu0 0.0
    %541 = vmatprep.subr.mxu0 0.0
    %542 = vmatpush1.msra.mxu0 0.0
    %543 = vmatprep.mubr.f32.mxu0 0.0
    %544 = vmatmul.mubr.f32.gmra.mrb[0].mxu0 %v461
    %v545 = vpop.f32.mrb[0].mxu0
    %v546 = vadd.f32 %v478, %v545
    %v547 = vpop.f32.mrb[0].mxu0
    %548 = vdwg.mxu0
    %v549 = vmax.f32 %v546, 0.0
    %v550 = vld [vmem:[#allocation7 + $0x128] sm:$0xff]
    %v551 = vld [vmem:[#allocation7 + $0x130] sm:$0xff]
    %v552 = vld [vmem:[#allocation7 + $0x138] sm:$0xff]
    %v553 = vld [vmem:[#allocation7 + $0x140] sm:$0xff]
    %v554 = vld [vmem:[#allocation7 + $0x148] sm:$0xff]
    %v555 = vld [vmem:[#allocation7 + $0x150] sm:$0xff]
    %v556 = vld [vmem:[#allocation7 + $0x158] sm:$0xff]
    %v557 = vld [vmem:[#allocation7 + $0x160] sm:$0xff]
    %v558 = vld [vmem:[#allocation7 + $0x168] sm:$0xff]
    %v559 = vld [vmem:[#allocation7 + $0x170] sm:$0xff]
    %v560 = vld [vmem:[#allocation7 + $0x178] sm:$0xff]
    %v561 = vld [vmem:[#allocation7 + $0x180] sm:$0xff]
    %v562 = vld [vmem:[#allocation7 + $0x188] sm:$0xff]
    %v563 = vld [vmem:[#allocation7 + $0x190] sm:$0xff]
    %v564 = vld [vmem:[#allocation7 + $0x198] sm:$0xff]
    %v565 = vld [vmem:[#allocation7 + $0x1a0] sm:$0xff]
    %v566 = vld [vmem:[#allocation7 + $0x22b] sm:$0x1]
    %567 = vmatprep.subr.mxu0 0.0
    %568 = vmatpush1.msra.mxu0 %v550
    %569 = vmatprep.subr.mxu0 0.0
    %570 = vmatpush1.msra.mxu0 %v551
    %571 = vmatprep.subr.mxu0 0.0
    %572 = vmatpush1.msra.mxu0 %v552
    %573 = vmatprep.subr.mxu0 0.0
    %574 = vmatpush1.msra.mxu0 %v553
    %575 = vmatprep.subr.mxu0 0.0
    %576 = vmatpush1.msra.mxu0 %v554
    %577 = vmatprep.subr.mxu0 0.0
    %578 = vmatpush1.msra.mxu0 %v555
    %579 = vmatprep.subr.mxu0 0.0
    %580 = vmatpush1.msra.mxu0 %v556
    %581 = vmatprep.subr.mxu0 0.0
    %582 = vmatpush1.msra.mxu0 %v557
    %583 = vmatprep.subr.mxu0 0.0
    %584 = vmatpush1.msra.mxu0 %v558
    %585 = vmatprep.subr.mxu0 0.0
    %586 = vmatpush1.msra.mxu0 %v559
    %587 = vmatprep.subr.mxu0 0.0
    %588 = vmatpush1.msra.mxu0 %v560
    %589 = vmatprep.subr.mxu0 0.0
    %590 = vmatpush1.msra.mxu0 %v561
    %591 = vmatprep.subr.mxu0 0.0
    %592 = vmatpush1.msra.mxu0 %v562
    %593 = vmatprep.subr.mxu0 0.0
    %594 = vmatpush1.msra.mxu0 %v563
    %595 = vmatprep.subr.mxu0 0.0
    %596 = vmatpush1.msra.mxu0 %v564
    %597 = vmatprep.subr.mxu0 0.0
    %598 = vmatpush1.msra.mxu0 %v565
    %599 = vmatprep.subr.mxu0 0.0
    %600 = vmatpush1.msra.mxu0 0.0
    %601 = vmatprep.subr.mxu0 0.0
    %602 = vmatpush1.msra.mxu0 0.0
    %603 = vmatprep.subr.mxu0 0.0
    %604 = vmatpush1.msra.mxu0 0.0
    %605 = vmatprep.subr.mxu0 0.0
    %606 = vmatpush1.msra.mxu0 0.0
    %607 = vmatprep.subr.mxu0 0.0
    %608 = vmatpush1.msra.mxu0 0.0
    %609 = vmatprep.subr.mxu0 0.0
    %610 = vmatpush1.msra.mxu0 0.0
    %611 = vmatprep.subr.mxu0 0.0
    %612 = vmatpush1.msra.mxu0 0.0
    %613 = vmatprep.subr.mxu0 0.0
    %614 = vmatpush1.msra.mxu0 0.0
    %615 = vmatprep.subr.mxu0 0.0
    %616 = vmatpush1.msra.mxu0 0.0
    %617 = vmatprep.subr.mxu0 0.0
    %618 = vmatpush1.msra.mxu0 0.0
    %619 = vmatprep.subr.mxu0 0.0
    %620 = vmatpush1.msra.mxu0 0.0
    %621 = vmatprep.subr.mxu0 0.0
    %622 = vmatpush1.msra.mxu0 0.0
    %623 = vmatprep.subr.mxu0 0.0
    %624 = vmatpush1.msra.mxu0 0.0
    %625 = vmatprep.subr.mxu0 0.0
    %626 = vmatpush1.msra.mxu0 0.0
    %627 = vmatprep.subr.mxu0 0.0
    %628 = vmatpush1.msra.mxu0 0.0
    %629 = vmatprep.subr.mxu0 0.0
    %630 = vmatpush1.msra.mxu0 0.0
    %631 = vmatprep.mubr.f32.mxu0 0.0
    %632 = vmatmul.mubr.f32.gmra.mrb[0].mxu0 %v549
    %v633 = vpop.f32.mrb[0].mxu0
    %v634 = vadd.f32 %v566, %v633
    %v635 = vpop.f32.mrb[0].mxu0
    %636 = vdwg.mxu0
    %v637 = vmax.f32 %v634, 0.0
    %v638 = vld [vmem:[#allocation7 + $0x1a8] sm:$0xff]
    %v639 = vld [vmem:[#allocation7 + $0x1b0] sm:$0xff]
    %v640 = vld [vmem:[#allocation7 + $0x1b8] sm:$0xff]
    %v641 = vld [vmem:[#allocation7 + $0x1c0] sm:$0xff]
    %v642 = vld [vmem:[#allocation7 + $0x1c8] sm:$0xff]
    %v643 = vld [vmem:[#allocation7 + $0x1d0] sm:$0xff]
    %v644 = vld [vmem:[#allocation7 + $0x1d8] sm:$0xff]
    %v645 = vld [vmem:[#allocation7 + $0x1e0] sm:$0xff]
    %v646 = vld [vmem:[#allocation7 + $0x1e8] sm:$0xff]
    %v647 = vld [vmem:[#allocation7 + $0x1f0] sm:$0xff]
    %v648 = vld [vmem:[#allocation7 + $0x1f8] sm:$0xff]
    %v649 = vld [vmem:[#allocation7 + $0x200] sm:$0xff]
    %v650 = vld [vmem:[#allocation7 + $0x208] sm:$0xff]
    %v651 = vld [vmem:[#allocation7 + $0x210] sm:$0xff]
    %v652 = vld [vmem:[#allocation7 + $0x218] sm:$0xff]
    %v653 = vld [vmem:[#allocation7 + $0x220] sm:$0xff]
    %v654 = vld [vmem:[#allocation7 + $0x22c] sm:$0x1]
    %655 = vmatprep.subr.mxu0 0.0
    %656 = vmatpush1.msra.mxu0 %v638
    %657 = vmatprep.subr.mxu0 0.0
    %658 = vmatpush1.msra.mxu0 %v639
    %659 = vmatprep.subr.mxu0 0.0
    %660 = vmatpush1.msra.mxu0 %v640
    %661 = vmatprep.subr.mxu0 0.0
    %662 = vmatpush1.msra.mxu0 %v641
    %663 = vmatprep.subr.mxu0 0.0
    %664 = vmatpush1.msra.mxu0 %v642
    %665 = vmatprep.subr.mxu0 0.0
    %666 = vmatpush1.msra.mxu0 %v643
    %667 = vmatprep.subr.mxu0 0.0
    %668 = vmatpush1.msra.mxu0 %v644
    %669 = vmatprep.subr.mxu0 0.0
    %670 = vmatpush1.msra.mxu0 %v645
    %671 = vmatprep.subr.mxu0 0.0
    %672 = vmatpush1.msra.mxu0 %v646
    %673 = vmatprep.subr.mxu0 0.0
    %674 = vmatpush1.msra.mxu0 %v647
    %675 = vmatprep.subr.mxu0 0.0
    %676 = vmatpush1.msra.mxu0 %v648
    %677 = vmatprep.subr.mxu0 0.0
    %678 = vmatpush1.msra.mxu0 %v649
    %679 = vmatprep.subr.mxu0 0.0
    %680 = vmatpush1.msra.mxu0 %v650
    %681 = vmatprep.subr.mxu0 0.0
    %682 = vmatpush1.msra.mxu0 %v651
    %683 = vmatprep.subr.mxu0 0.0
    %684 = vmatpush1.msra.mxu0 %v652
    %685 = vmatprep.subr.mxu0 0.0
    %686 = vmatpush1.msra.mxu0 %v653
    %687 = vmatprep.subr.mxu0 0.0
    %688 = vmatpush1.msra.mxu0 0.0
    %689 = vmatprep.subr.mxu0 0.0
    %690 = vmatpush1.msra.mxu0 0.0
    %691 = vmatprep.subr.mxu0 0.0
    %692 = vmatpush1.msra.mxu0 0.0
    %693 = vmatprep.subr.mxu0 0.0
    %694 = vmatpush1.msra.mxu0 0.0
    %695 = vmatprep.subr.mxu0 0.0
    %696 = vmatpush1.msra.mxu0 0.0
    %697 = vmatprep.subr.mxu0 0.0
    %698 = vmatpush1.msra.mxu0 0.0
    %699 = vmatprep.subr.mxu0 0.0
    %700 = vmatpush1.msra.mxu0 0.0
    %701 = vmatprep.subr.mxu0 0.0
    %702 = vmatpush1.msra.mxu0 0.0
    %703 = vmatprep.subr.mxu0 0.0
    %704 = vmatpush1.msra.mxu0 0.0
    %705 = vmatprep.subr.mxu0 0.0
    %706 = vmatpush1.msra.mxu0 0.0
    %707 = vmatprep.subr.mxu0 0.0
    %708 = vmatpush1.msra.mxu0 0.0
    %709 = vmatprep.subr.mxu0 0.0
    %710 = vmatpush1.msra.mxu0 0.0
    %711 = vmatprep.subr.mxu0 0.0
    %712 = vmatpush1.msra.mxu0 0.0
    %713 = vmatprep.subr.mxu0 0.0
    %714 = vmatpush1.msra.mxu0 0.0
    %715 = vmatprep.subr.mxu0 0.0
    %716 = vmatpush1.msra.mxu0 0.0
    %717 = vmatprep.subr.mxu0 0.0
    %718 = vmatpush1.msra.mxu0 0.0
    %719 = vmatprep.mubr.f32.mxu0 0.0
    %720 = vmatmul.mubr.f32.gmra.mrb[0].mxu0 %v637
    %v721 = vpop.f32.mrb[0].mxu0
    %v722 = vadd.f32 %v654, %v721
    %v723 = vpop.f32.mrb[0].mxu0
    %724 = vdwg.mxu0
    %v725 = vxor.u32 %v722, 2147483648
    %v726 = vmul.f32 %v725, 1.442695
    %v727 = vpow.pop %v726
    %v728 = vadd.f32 %v727, 1.0
    %v729 = vrcp.pop %v728
    %v730 = vmul.f32 1.0, %v729
    %vm731 = vcmask 0
    %732 = vst.msk [vmem:[#allocation8] sm:$0x1] %vm731, %v730
    // Predicated region
    $region26: #{reward_network_forward.1} parent=1 // pred_check
      _
    $region27: #{reward_network_forward.1} parent=1 // pred_check_branch
      %734 = sbr.rel (0) target = $region29
    $region28: #{reward_network_forward.1} parent=1 // pred_region
      %s736 = ssub.s32 16, 16
      %737 = vsyncadd [#allocation4], %s736
      %s739 = sshll.u32 [#allocation8], 4
      %s740 = int_to_ptr.vmem [resolvable:$true] %s739
      %742 = dma.vmem_to_hbm [thread:$0]  %s740, 16, %s3, [#allocation4]
    $region29: #{reward_network_forward.1} parent=1 // pred_fallthru
      _
    // Predicated region
    $region30: #{reward_network_forward.1} parent=1 // pred_check
      _
    $region31: #{reward_network_forward.1} parent=1 // pred_check_branch
      %744 = sbr.rel (0) target = $region33
    $region32: #{reward_network_forward.1} parent=1 // pred_region
      %745 = dma.done [#allocation4], 16
    $region33: #{reward_network_forward.1} parent=1 // pred_fallthru
      _
    %746 = vsyncpa [#allocation3], 1
    %747 = vsyncpa [#allocation6], 1
    %748 = vsyncpa [#allocation4], 1

</llo_original>
